<compile_context>
chip_gen: v7x
topology: tpu7x:2x2x1
jax: 0.10.0
libtpu: 0.0.40
codegen_flags: <defaults>
</compile_context>

<pallas_src>
import functools

import jax
import jax.numpy as jnp
from jax.experimental import pallas as pl
from jax.experimental.pallas import tpu as pltpu


def _cdiv(a, b):
    return (a + b - 1) // b


def _round_up(a, b):
    return _cdiv(a, b) * b


def _default_block_bytes():
    """Per-generation input block size (amortize ~0.35us per-grid-step cost)."""
    try:
        kind = jax.devices()[0].device_kind.lower()
    except Exception:
        return 4 * 1024 * 1024
    if "7" in kind:                       # v7x: ~3.2 TB/s HBM -> bigger blocks
        return 8 * 1024 * 1024
    if "v5 lite" in kind or "v5e" in kind:  # v5e: 16 MiB scoped-VMEM default
        return 2 * 1024 * 1024
    return 4 * 1024 * 1024                # v6e and other generations


def _gap_direct_kernel(x_ref, o_ref, *, inv_hw):
    # Full spatial extent in one tile: single pass, no accumulator, no pl.when.
    x = x_ref[...].astype(jnp.float32)
    o_ref[...] = (jnp.sum(x, axis=-1, keepdims=True)
                  * jnp.float32(inv_hw)).astype(o_ref.dtype)


def _gap_acc_kernel(x_ref, o_ref, acc_ref, *, inv_hw, s_total, ts, lane_groups,
                    mask_tail):
    k = pl.program_id(1)

    @pl.when(k == 0)
    def _init():
        acc_ref[...] = jnp.zeros_like(acc_ref)

    # Lane-dense accumulation: fold 128-lane groups with pure VPU adds; the
    # ragged spatial tail (if any) is masked in-kernel instead of padding HBM.
    part = None
    for g in range(lane_groups):
        xg = x_ref[:, g * 128:(g + 1) * 128].astype(jnp.float32)
        if mask_tail:
            lane = jax.lax.broadcasted_iota(jnp.int32, xg.shape, 1)
            xg = jnp.where(k * ts + g * 128 + lane < s_total, xg, 0.0)
        part = xg if part is None else part + xg
    acc_ref[...] += part

    @pl.when(k == pl.num_programs(1) - 1)
    def _finalize():
        # Single cross-lane (XLU) reduce + scale + cast, only once per row tile.
        total = jnp.sum(acc_ref[...], axis=-1, keepdims=True)
        o_ref[...] = (total * jnp.float32(inv_hw)).astype(o_ref.dtype)


def global_avg_pool2d(x, *, target_block_bytes=None, ts_max=8192):
    """Pallas equivalent of GlobalAvgPool2d.forward: (N, C, H, W) -> (N, C)."""
    N, C, H, W = x.shape
    R, S = N * C, H * W
    if target_block_bytes is None:
        target_block_bytes = _default_block_bytes()

    itemsize = jnp.dtype(x.dtype).itemsize
    pack = max(8, 32 // itemsize)         # sublane packing: f32->8, bf16->16, int8->32
    s_lanes = _round_up(S, 128)           # VMEM lane footprint per row

    xr = x.reshape(R, S)                  # each row is an independent reduction
    inv_hw = 1.0 / float(S)

    single_pass = s_lanes <= ts_max
    if single_pass:
        TS = S                            # full-dim block: legal, one contiguous DMA
        grid_k = 1
        ts_vmem = s_lanes
    else:
        # TS divides the 128-rounded spatial extent as evenly as possible;
        # any remaining tail is masked in-kernel (never padded in HBM).
        n_spatial = _cdiv(s_lanes, ts_max)
        TS = _round_up(_cdiv(s_lanes, n_spatial), 128)
        grid_k = _cdiv(S, TS)
        ts_vmem = TS

    # Row tile: multiple of sublane packing, sized so the block (budgeted at
    # its f32-widened VMEM footprint) stays near target_block_bytes.
    row_bytes = ts_vmem * max(itemsize, 4)
    tm_target = max(pack, (target_block_bytes // row_bytes) // pack * pack)
    # Megacore: keep >=2 row tiles so the "parallel" axis can shard across TCs.
    if tm_target >= R and R > 2 * pack:
        tm_target = _round_up(_cdiv(R, 2), pack)
    TM = min(tm_target, R)                # TM == R (full dim) is legal for small R
    grid_r = _cdiv(R, TM)
    R_out = grid_r * TM                   # output rounded to whole row tiles

    out_shape = jax.ShapeDtypeStruct((R_out, 1), x.dtype)
    cost = pl.CostEstimate(flops=R * S, transcendentals=0,
                           bytes_accessed=R * S * itemsize + R * itemsize)

    if single_pass:
        out = pl.pallas_call(
            functools.partial(_gap_direct_kernel, inv_hw=inv_hw),
            out_shape=out_shape,
            grid_spec=pltpu.PrefetchScalarGridSpec(
                num_scalar_prefetch=0,
                grid=(grid_r,),
                in_specs=[pl.BlockSpec((TM, S), lambda i: (i, 0))],
                out_specs=pl.BlockSpec((TM, 1), lambda i: (i, 0)),
            ),
            compiler_params=pltpu.CompilerParams(
                dimension_semantics=("parallel",)),
            cost_estimate=cost,
        )(xr)
    else:
        out = pl.pallas_call(
            functools.partial(
                _gap_acc_kernel, inv_hw=inv_hw, s_total=S, ts=TS,
                lane_groups=TS // 128, mask_tail=(S % TS) != 0),
            out_shape=out_shape,
            grid_spec=pltpu.PrefetchScalarGridSpec(
                num_scalar_prefetch=0,
                grid=(grid_r, grid_k),
                in_specs=[pl.BlockSpec((TM, TS), lambda i, k: (i, k))],
                out_specs=pl.BlockSpec((TM, 1), lambda i, k: (i, 0)),
                scratch_shapes=[pltpu.VMEM((TM, 128), jnp.float32)],
            ),
            compiler_params=pltpu.CompilerParams(
                dimension_semantics=("parallel", "arbitrary")),
            cost_estimate=cost,
        )(xr)

    if R_out != R:
        out = out[:R]
    return out.reshape(N, C)


if __name__ == "__main__":
    key = jax.random.PRNGKey(0)

    # Primary small shape consistent with the module.
    x = jax.random.normal(key, (2, 4, 16, 16), dtype=jnp.float32)
    out = jax.block_until_ready(global_avg_pool2d(x))
    ref = jnp.mean(x, axis=(2, 3))
    assert out.shape == (2, 4), out.shape
    assert jnp.allclose(out, ref, atol=1e-5, rtol=1e-5)

    # 7x7 darknet-style spatial extent, non-multiple-of-8 row count.
    x2 = jax.random.normal(jax.random.PRNGKey(1), (2, 3, 7, 7), dtype=jnp.float32)
    out2 = jax.block_until_ready(global_avg_pool2d(x2))
    ref2 = jnp.mean(x2, axis=(2, 3))
    assert out2.shape == (2, 3), out2.shape
    assert jnp.allclose(out2, ref2, atol=1e-5, rtol=1e-5)

    # bf16 path: narrow dtype DMA'd as-is, f32 accumulation in-kernel.
    x3 = jax.random.normal(jax.random.PRNGKey(2), (2, 8, 16, 16), dtype=jnp.bfloat16)
    out3 = jax.block_until_ready(global_avg_pool2d(x3))
    ref3 = jnp.mean(x3.astype(jnp.float32), axis=(2, 3)).astype(jnp.bfloat16)
    assert out3.shape == (2, 8), out3.shape
    assert jnp.allclose(out3.astype(jnp.float32), ref3.astype(jnp.float32),
                        atol=2e-2, rtol=2e-2)

    # Multi-tile spatial path with a masked ragged tail (S=1280, TS=512).
    x4 = jax.random.normal(jax.random.PRNGKey(3), (1, 2, 32, 40), dtype=jnp.float32)
    out4 = jax.block_until_ready(global_avg_pool2d(x4, ts_max=512))
    ref4 = jnp.mean(x4, axis=(2, 3))
    assert out4.shape == (1, 2), out4.shape
    assert jnp.allclose(out4, ref4, atol=1e-5, rtol=1e-5)

    # Partial last row tile (R=202 with TM=8) -> exercises output rounding/slice.
    x5 = jax.random.normal(jax.random.PRNGKey(4), (2, 101, 16, 16), dtype=jnp.float32)
    out5 = jax.block_until_ready(global_avg_pool2d(x5, target_block_bytes=8192))
    ref5 = jnp.mean(x5, axis=(2, 3))
    assert out5.shape == (2, 101), out5.shape
    assert jnp.allclose(out5, ref5, atol=1e-5, rtol=1e-5)

    print("KERNEL_OK")
</pallas_src>

<mosaic_0001>
module attributes {stable_mosaic.version = 11 : i64} {
  func.func @_gap_direct_kernel(%arg0: i32, %arg1: memref<8x256xf32, #tpu.memory_space<vmem>>, %arg2: memref<8x1xf32, #tpu.memory_space<vmem>>) attributes {dimension_semantics = [#tpu.dimension_semantics<parallel>], iteration_bounds = array<i64: 1>, scalar_prefetch = 0 : i64, scratch_operands = 0 : i64, tpu.core_type = #tpu.core_type<tc>, window_params = [{transform_indices = @transform_0, window_bounds = array<i64: 8, 256>}, {transform_indices = @transform_1, window_bounds = array<i64: 8, 1>}]} {
    %c0 = arith.constant 0 : index
    %c0_0 = arith.constant 0 : index
    %0 = vector.load %arg1[%c0, %c0_0] : memref<8x256xf32, #tpu.memory_space<vmem>>, vector<8x256xf32>
    %cst = arith.constant dense<0.000000e+00> : vector<8xf32>
    %1 = vector.multi_reduction <add>, %0, %cst [1] : vector<8x256xf32> to vector<8xf32>
    %2 = vector.shape_cast %1 : vector<8xf32> to vector<8x1xf32>
    %cst_1 = arith.constant 3.906250e-03 : f32
    %3 = vector.broadcast %cst_1 : f32 to vector<8x1xf32>
    %4 = arith.mulf %2, %3 : vector<8x1xf32>
    %c0_2 = arith.constant 0 : index
    %c0_3 = arith.constant 0 : index
    %5 = vector.load %arg2[%c0_2, %c0_3] : memref<8x1xf32, #tpu.memory_space<vmem>>, vector<8x1xf32>
    tpu.vector_store %arg2[%c0_2, %c0_3], %4 {strides = array<i32>} : memref<8x1xf32, #tpu.memory_space<vmem>>, vector<8x1xf32>,
    return
  }
  func.func @transform_0(%arg0: i32) -> (i32, i32) {
    %c0_i32 = arith.constant 0 : i32
    %c0_i32_0 = arith.constant 0 : i32
    return %arg0, %c0_i32 : i32, i32
  }
  func.func @transform_1(%arg0: i32) -> (i32, i32) {
    %c0_i32 = arith.constant 0 : i32
    %c0_i32_0 = arith.constant 0 : i32
    return %arg0, %c0_i32 : i32, i32
  }
}

</mosaic_0001>

<llo_original>
// kernel: tpu_custom_call.1
$region0: #{tpu_custom_call.1}
  #allocation0 [shape = 'u32[]', space=smem, size = 0x4, offset = 0x4, fixed_abs, tag = 'smem constant byte address 0x4 - core index']
  #allocation1 [shape = 'u32[144,128]{1,0:T(1,128)}', space=vmem, size = 0x12000, scoped, tag = 'internal scratch']
  %s0 = inlined_call_operand.hbm [shape: f32[8,256], index: 0, kind: input, shape index: {}]
  %s1 = inlined_call_operand.vmem [shape: f32[8,1], index: 1, kind: output, shape index: {}]
  %s2 = sld [smem:[#allocation0]]
  $region18: #{tpu_custom_call.1} parent=0
    _
  %s4 = ssub.s32 1, %s2
  %s5 = scalar_select 0, %s4, %s2
  $region1: #{tpu_custom_call.1} parent=0
    #allocation2 [shape = 'u8[8192]{0}', space=vmem, size = 0x2000, scoped, tag = 'input window, operand 0, single buffered']
    #allocation3 [shape = 's32[1]{0}', space=sflag, size = 0x4, scoped, tag = 'scoped memory for tpu_custom_call.1']
    %6 = vsyncpa [#allocation3], 0
    // Predicated region
    $region2: #{tpu_custom_call.1} parent=1 // pred_check
      _
    $region3: #{tpu_custom_call.1} parent=1 // pred_check_branch
      %8 = sbr.rel (0) target = $region5
    $region4: #{tpu_custom_call.1} parent=1 // pred_region
      %s10 = ssub.s32 256, 256
      %11 = vsyncadd [#allocation3], %s10
      %s13 = sshll.u32 [#allocation2], 4
      %s14 = int_to_ptr.vmem [resolvable:$true] %s13
      %16 = dma.hbm_to_vmem [thread:$0]  %s0, 256, %s14, [#allocation3]
    $region5: #{tpu_custom_call.1} parent=1 // pred_fallthru
      _
    // Predicated region
    $region6: #{tpu_custom_call.1} parent=1 // pred_check
      _
    $region7: #{tpu_custom_call.1} parent=1 // pred_check_branch
      %18 = sbr.rel (0) target = $region9
    $region8: #{tpu_custom_call.1} parent=1 // pred_region
      %19 = dma.done [#allocation3], 256
    $region9: #{tpu_custom_call.1} parent=1 // pred_fallthru
      _
    %v20 = vld [vmem:[#allocation2] sm:$0xff]
    %v21 = vld [vmem:[#allocation2 + $0x8] sm:$0xff]
    %v22 = vadd.f32 %v20, %v21
    %23 = vadd.xlane.f32.xlu0 %v22
    %v24 = vpop.xlane.xlu0 %23
    %v25 = vmul.f32 %v24, 0.00390625
    %vm26 = vcmask 7168
    %27 = vst.msk [vmem:[%s1] sm:$0xff] %vm26, %v25
    // Predicated region
    $region10: #{tpu_custom_call.1} parent=1 // pred_check
      _
    $region11: #{tpu_custom_call.1} parent=1 // pred_check_branch
      %29 = sbr.rel (0) target = $region13
    $region12: #{tpu_custom_call.1} parent=1 // pred_region
      _
    $region13: #{tpu_custom_call.1} parent=1 // pred_fallthru
      _
    // Predicated region
    $region14: #{tpu_custom_call.1} parent=1 // pred_check
      _
    $region15: #{tpu_custom_call.1} parent=1 // pred_check_branch
      %31 = sbr.rel (0) target = $region17
    $region16: #{tpu_custom_call.1} parent=1 // pred_region
      _
    $region17: #{tpu_custom_call.1} parent=1 // pred_fallthru
      _
    %32 = vsyncpa [#allocation3], 1

</llo_original>
